<compile_context>
chip_gen: v7x
topology: tpu7x:2x2x1
jax: 0.10.0
libtpu: 0.0.40
codegen_flags: <defaults>
</compile_context>

<pallas_src>
import functools

import jax
import jax.numpy as jnp
from jax import lax
from jax.experimental import pallas as pl
from jax.experimental.pallas import tpu as pltpu


def _round_up(x, m):
    return (x + m - 1) // m * m


def _pick_tile(dim, cap):
    """Largest multiple of 128 <= cap that divides dim, or the full dim if unaligned."""
    if dim % 128 != 0:
        return dim                      # full-dim block (no HBM pad / slice)
    t = min(cap, dim)
    while dim % t:
        t -= 128
    return t


# --------------------------------------------------------------------------
# Pallas kernel 1: tiled matmul, bf16 operands, f32 accumulate,
# fused bias + activation + scale + residual epilogue.
# --------------------------------------------------------------------------
def _mm_kernel(*refs, act, scale, has_res):
    if has_res:
        a_ref, b_ref, bias_ref, res_ref, o_ref, acc_ref = refs
    else:
        a_ref, b_ref, bias_ref, o_ref, acc_ref = refs
        res_ref = None

    @pl.when(pl.program_id(2) == 0)
    def _():
        acc_ref[...] = jnp.zeros_like(acc_ref)

    acc_ref[...] += jnp.dot(a_ref[...], b_ref[...],
                            preferred_element_type=jnp.float32)

    @pl.when(pl.program_id(2) == pl.num_programs(2) - 1)
    def _():
        y = acc_ref[...] + bias_ref[...]
        if act == 'relu':
            y = jnp.maximum(y, 0.0)
        elif act == 'silu':
            y = y * jax.nn.sigmoid(y)
        if scale != 1.0:
            y = y * scale
        if has_res:
            y = y + res_ref[...]
        o_ref[...] = y.astype(o_ref.dtype)


def _mm_call(a, b, bias, res, act, scale, out_dtype):
    M, K = a.shape
    N = b.shape[1]
    tm = min(256, _round_up(M, 16))
    Mp = _round_up(M, tm)
    tk = _pick_tile(K, 512)
    tn = _pick_tile(N, 512)

    a_p = a.astype(jnp.bfloat16)
    if Mp != M:
        a_p = jnp.pad(a_p, ((0, Mp - M), (0, 0)))
    b_p = b.astype(jnp.bfloat16)
    bias_p = bias.astype(jnp.float32).reshape(1, N)

    inputs = [a_p, b_p, bias_p]
    in_specs = [pl.BlockSpec((tm, tk), lambda i, j, k: (i, k)),
                pl.BlockSpec((tk, tn), lambda i, j, k: (k, j)),
                pl.BlockSpec((1, tn), lambda i, j, k: (0, j))]
    has_res = res is not None
    if has_res:
        r_p = res.astype(jnp.float32)
        if Mp != M:
            r_p = jnp.pad(r_p, ((0, Mp - M), (0, 0)))
        inputs.append(r_p)
        in_specs.append(pl.BlockSpec((tm, tn), lambda i, j, k: (i, j)))

    grid = (Mp // tm, N // tn, K // tk)
    kernel = functools.partial(_mm_kernel, act=act, scale=scale, has_res=has_res)
    out = pl.pallas_call(
        kernel,
        out_shape=jax.ShapeDtypeStruct((Mp, N), out_dtype),
        grid_spec=pltpu.PrefetchScalarGridSpec(
            num_scalar_prefetch=0,
            grid=grid,
            in_specs=in_specs,
            out_specs=pl.BlockSpec((tm, tn), lambda i, j, k: (i, j)),
            scratch_shapes=[pltpu.VMEM((tm, tn), jnp.float32)],
        ),
        compiler_params=pltpu.CompilerParams(
            dimension_semantics=("parallel", "parallel", "arbitrary")),
    )(*inputs)
    if Mp != M:
        out = out[:M]
    return out


@functools.partial(jax.jit, static_argnames=('act', 'scale', 'out_dtype'))
def _mm_jit(a, b, bias, *, act, scale, out_dtype):
    return _mm_call(a, b, bias, None, act, scale, out_dtype)


@functools.partial(jax.jit, static_argnames=('act', 'scale', 'out_dtype'))
def _mm_res_jit(a, b, bias, res, *, act, scale, out_dtype):
    return _mm_call(a, b, bias, res, act, scale, out_dtype)


def linear(x, w, b=None, act='none', scale=1.0, residual=None,
           out_dtype=jnp.float32):
    shp = x.shape
    N = w.shape[1]
    if b is None:
        b = jnp.zeros((N,), jnp.float32)
    a2 = x.reshape(-1, shp[-1])
    if residual is None:
        y = _mm_jit(a2, w, b, act=act, scale=float(scale), out_dtype=out_dtype)
    else:
        y = _mm_res_jit(a2, w, b, residual.reshape(-1, N),
                        act=act, scale=float(scale), out_dtype=out_dtype)
    return y.reshape(shp[:-1] + (N,))


# --------------------------------------------------------------------------
# Pallas kernel 2: matmul with fused GLU epilogue (two weight halves, two accs)
# --------------------------------------------------------------------------
def _glu_kernel(a_ref, b1_ref, b2_ref, bias1_ref, bias2_ref, o_ref,
                acc1_ref, acc2_ref):
    @pl.when(pl.program_id(2) == 0)
    def _():
        acc1_ref[...] = jnp.zeros_like(acc1_ref)
        acc2_ref[...] = jnp.zeros_like(acc2_ref)

    a = a_ref[...]
    acc1_ref[...] += jnp.dot(a, b1_ref[...], preferred_element_type=jnp.float32)
    acc2_ref[...] += jnp.dot(a, b2_ref[...], preferred_element_type=jnp.float32)

    @pl.when(pl.program_id(2) == pl.num_programs(2) - 1)
    def _():
        ga = acc1_ref[...] + bias1_ref[...]
        gb = acc2_ref[...] + bias2_ref[...]
        o_ref[...] = (ga * jax.nn.sigmoid(gb)).astype(o_ref.dtype)


@jax.jit
def _glu_jit(a, b1, b2, bias1, bias2):
    M, K = a.shape
    N = b1.shape[1]
    tm = min(256, _round_up(M, 16))
    Mp = _round_up(M, tm)
    tk = _pick_tile(K, 512)
    tn = _pick_tile(N, 512)
    a_p = a.astype(jnp.bfloat16)
    if Mp != M:
        a_p = jnp.pad(a_p, ((0, Mp - M), (0, 0)))
    grid = (Mp // tm, N // tn, K // tk)
    out = pl.pallas_call(
        _glu_kernel,
        out_shape=jax.ShapeDtypeStruct((Mp, N), jnp.bfloat16),
        grid_spec=pltpu.PrefetchScalarGridSpec(
            num_scalar_prefetch=0,
            grid=grid,
            in_specs=[
                pl.BlockSpec((tm, tk), lambda i, j, k: (i, k)),
                pl.BlockSpec((tk, tn), lambda i, j, k: (k, j)),
                pl.BlockSpec((tk, tn), lambda i, j, k: (k, j)),
                pl.BlockSpec((1, tn), lambda i, j, k: (0, j)),
                pl.BlockSpec((1, tn), lambda i, j, k: (0, j)),
            ],
            out_specs=pl.BlockSpec((tm, tn), lambda i, j, k: (i, j)),
            scratch_shapes=[pltpu.VMEM((tm, tn), jnp.float32),
                            pltpu.VMEM((tm, tn), jnp.float32)],
        ),
        compiler_params=pltpu.CompilerParams(
            dimension_semantics=("parallel", "parallel", "arbitrary")),
    )(a_p, b1.astype(jnp.bfloat16), b2.astype(jnp.bfloat16),
      bias1.astype(jnp.float32).reshape(1, N),
      bias2.astype(jnp.float32).reshape(1, N))
    if Mp != M:
        out = out[:M]
    return out


def linear_glu(x, w1, w2, b1, b2):
    shp = x.shape
    N = w1.shape[1]
    y = _glu_jit(x.reshape(-1, shp[-1]), w1, w2, b1, b2)
    return y.reshape(shp[:-1] + (N,))


# --------------------------------------------------------------------------
# Pallas kernel 3: fused multi-head self-attention core.
# Content scores, additive (rel-pos + mask) bias, softmax and attn@V stay in VMEM.
# --------------------------------------------------------------------------
def _attn_kernel(qu_ref, kt_ref, v_ref, bias_ref, o_ref, *, H, scale):
    for h in range(H):
        content = jnp.dot(qu_ref[0, h], kt_ref[0, h],
                          preferred_element_type=jnp.float32)        # (T, T)
        scores = content * scale + bias_ref[0, h]
        m = jnp.max(scores, axis=-1, keepdims=True)
        e = jnp.exp(scores - m)
        s = jnp.sum(e, axis=-1, keepdims=True)
        attn = (e * pl.reciprocal(s, approx=True)).astype(jnp.bfloat16)
        out_h = jnp.dot(attn, v_ref[0, h],
                        preferred_element_type=jnp.float32)          # (T, dh)
        o_ref[0, h] = out_h.astype(o_ref.dtype)


@functools.partial(jax.jit, static_argnames=('scale',))
def _attn_impl(qu, kt, v, bias, *, scale):
    B, H, T, dh = qu.shape
    kernel = functools.partial(_attn_kernel, H=H, scale=scale)
    return pl.pallas_call(
        kernel,
        out_shape=jax.ShapeDtypeStruct((B, H, T, dh), jnp.bfloat16),
        grid_spec=pltpu.PrefetchScalarGridSpec(
            num_scalar_prefetch=0,
            grid=(B,),
            in_specs=[
                pl.BlockSpec((1, H, T, dh), lambda b: (b, 0, 0, 0)),
                pl.BlockSpec((1, H, dh, T), lambda b: (b, 0, 0, 0)),
                pl.BlockSpec((1, H, T, dh), lambda b: (b, 0, 0, 0)),
                pl.BlockSpec((1, H, T, T), lambda b: (b, 0, 0, 0)),
            ],
            out_specs=pl.BlockSpec((1, H, T, dh), lambda b: (b, 0, 0, 0)),
        ),
        compiler_params=pltpu.CompilerParams(dimension_semantics=("parallel",)),
    )(qu, kt, v, bias)


# --------------------------------------------------------------------------
# Pallas kernel 4: depthwise Conv1d (k=15) as shift-FMA on channels-last layout,
# with BatchNorm (eval) scale/bias and SiLU fused.
# --------------------------------------------------------------------------
def _dwconv_kernel(x_ref, w_ref, scale_ref, bias_ref, o_ref):
    Tout = o_ref.shape[1]
    K = w_ref.shape[0]
    x = x_ref[0].astype(jnp.float32)                # (Tout + K - 1, C)
    w = w_ref[...]                                  # (K, C) f32
    acc = jnp.zeros(o_ref.shape[1:], jnp.float32)   # (Tout, C)
    for k in range(K):
        acc = acc + x[k:k + Tout, :] * w[k:k + 1, :]
    y = acc * scale_ref[...] + bias_ref[...]
    o_ref[0] = (y * jax.nn.sigmoid(y)).astype(o_ref.dtype)


def depthwise_conv_bn_silu(x, w, bn_scale, bn_bias, stride):
    # x: (B, T, C); w: (K, C); 'same' padding; BN(eval)+SiLU fused into the kernel.
    B, T, C = x.shape
    K = w.shape[0]
    pad = (K - 1) // 2
    xp = jnp.pad(x, ((0, 0), (pad, pad), (0, 0)))
    out = pl.pallas_call(
        _dwconv_kernel,
        out_shape=jax.ShapeDtypeStruct((B, T, C), jnp.bfloat16),
        grid_spec=pltpu.PrefetchScalarGridSpec(
            num_scalar_prefetch=0,
            grid=(B,),
            in_specs=[
                pl.BlockSpec((1, T + 2 * pad, C), lambda b: (b, 0, 0)),
                pl.BlockSpec((K, C), lambda b: (0, 0)),
                pl.BlockSpec((1, C), lambda b: (0, 0)),
                pl.BlockSpec((1, C), lambda b: (0, 0)),
            ],
            out_specs=pl.BlockSpec((1, T, C), lambda b: (b, 0, 0)),
        ),
        compiler_params=pltpu.CompilerParams(dimension_semantics=("parallel",)),
    )(xp, w.astype(jnp.float32), bn_scale.reshape(1, C), bn_bias.reshape(1, C))
    if stride > 1:
        out = out[:, ::stride]   # stride-k depthwise conv == strided rows of stride-1 output
    return out


# --------------------------------------------------------------------------
# Layer helpers (glue fused by XLA under jit) — channels-last everywhere
# --------------------------------------------------------------------------
def layer_norm(x, g, b, eps=1e-5):
    mu = jnp.mean(x, axis=-1, keepdims=True)
    var = jnp.mean((x - mu) ** 2, axis=-1, keepdims=True)
    return (x - mu) / jnp.sqrt(var + eps) * g + b


def batch_norm(x, g, b, eps=1e-5):
    # eval-mode BN: running_mean=0, running_var=1, channels on the last axis
    # TODO(synk): trained running stats must be plumbed in for a converted checkpoint.
    return x * (g / jnp.sqrt(1.0 + eps)) + b


def relu(x):
    return jnp.maximum(x, 0.0)


def conv2d(x, w, b, stride, padding):
    # x: (N, H, W, C)  w: (KH, KW, I, O) — channels-last MXU conv, bf16 operands.
    y = lax.conv_general_dilated(
        x.astype(jnp.bfloat16), w.astype(jnp.bfloat16),
        window_strides=stride,
        padding=[(padding[0], padding[0]), (padding[1], padding[1])],
        dimension_numbers=('NHWC', 'HWIO', 'NHWC'),
        preferred_element_type=jnp.float32)
    if b is not None:
        y = y + b
    return y


def conv3d(x, w, b, stride, padding):
    # x: (N, T, H, W, C)  w: (KT, KH, KW, I, O)
    y = lax.conv_general_dilated(
        x.astype(jnp.bfloat16), w.astype(jnp.bfloat16),
        window_strides=stride,
        padding=[(p, p) for p in padding],
        dimension_numbers=('NDHWC', 'DHWIO', 'NDHWC'),
        preferred_element_type=jnp.float32)
    if b is not None:
        y = y + b
    return y


# --------------------------------------------------------------------------
# ResNet18 (no stem) block — channels-last
# --------------------------------------------------------------------------
def resnet_block(x, p, stride):
    h = conv2d(x, p['w1'], None, stride, (1, 1))
    h = batch_norm(h, p['bn1_g'], p['bn1_b'])
    h = relu(h)
    h = conv2d(h, p['w2'], None, (1, 1), (1, 1))
    h = batch_norm(h, p['bn2_g'], p['bn2_b'])
    if 'w_sc' in p:
        sc = conv2d(x, p['w_sc'], None, stride, (0, 0))
        sc = batch_norm(sc, p['bn_sc_g'], p['bn_sc_b'])
    else:
        sc = x
    return relu(h + sc)


# --------------------------------------------------------------------------
# Relative-position multi-head self attention (fused QKV + Pallas attention core)
# --------------------------------------------------------------------------
def _rel_to_abs(x):
    # x: (B, H, T, 2T-1) with columns ordered by descending relative position
    # (T-1 .. -(T-1)); returns (B, H, T, T) with out[..., i, j] = x[..., i, j - i + T - 1],
    # i.e. the value for relative position (i - j).
    B, H, T, L = x.shape
    x = jnp.pad(x, ((0, 0), (0, 0), (0, 0), (0, 1)))          # (B, H, T, 2T)
    x = x.reshape(B, H, 2 * T * T)
    x = jnp.pad(x, ((0, 0), (0, 0), (0, T - 1)))
    x = x.reshape(B, H, T + 1, 2 * T - 1)
    return x[:, :, :T, T - 1:]


def rel_pos_mhsa(x, mask_add, p, num_heads=4):
    # Returns the pre-output-projection attention result (B, T, D) in bf16;
    # the Wo projection (+ residual) is fused into a matmul epilogue by the caller.
    B, T, D = x.shape
    H = num_heads
    dh = D // H
    scale = 1.0 / float(dh) ** 0.5

    qkv = linear(x, p['wqkv'], p['bqkv'], out_dtype=jnp.bfloat16)    # (B, T, 3D)
    q, k, v = qkv[..., :D], qkv[..., D:2 * D], qkv[..., 2 * D:]
    qh = q.reshape(B, T, H, dh).transpose(0, 2, 1, 3)                # (B, H, T, dh)
    kt = k.reshape(B, T, H, dh).transpose(0, 2, 3, 1)                # (B, H, dh, T)
    vh = v.reshape(B, T, H, dh).transpose(0, 2, 1, 3)                # (B, H, T, dh)

    u = p['u'].astype(jnp.bfloat16)
    vb = p['v'].astype(jnp.bfloat16)
    qu = qh + u[None, :, None, :]
    qv = qh + vb[None, :, None, :]

    # relative sinusoidal positional encodings, descending positions T-1 .. -(T-1)
    rel = jnp.arange(T - 1, -T, -1, dtype=jnp.float32)               # (2T-1,)
    inv_freq = 1.0 / (10000.0 ** (jnp.arange(0, D, 2, dtype=jnp.float32) / D))
    ang = rel[:, None] * inv_freq[None, :]
    pos_enc = jnp.concatenate([jnp.sin(ang), jnp.cos(ang)], axis=-1)  # (2T-1, D)
    pos = linear(pos_enc, p['wpos'], out_dtype=jnp.bfloat16)          # (2T-1, D)
    pos_h = pos.reshape(2 * T - 1, H, dh).transpose(1, 0, 2)          # (H, 2T-1, dh)

    pfull = jnp.einsum('bhtd,hld->bhtl', qv, pos_h,
                       preferred_element_type=jnp.float32)            # (B, H, T, 2T-1)
    pos_score = _rel_to_abs(pfull)                                     # (B, H, T, T)
    bias = pos_score * scale + mask_add[:, :, None, :]                 # + key padding mask

    out = _attn_impl(qu, kt, vh, bias, scale=scale)                    # (B, H, T, dh) bf16
    return out.transpose(0, 2, 1, 3).reshape(B, T, D)


# --------------------------------------------------------------------------
# Efficient-Conformer block
# --------------------------------------------------------------------------
def conformer_block(x, mask_add, p, stride):
    # FFN 1 (half-step): SiLU, 0.5 scale and residual fused into matmul epilogues
    h = layer_norm(x, p['ff1_ln_g'], p['ff1_ln_b'])
    h = linear(h, p['ff1_w1'], p['ff1_b1'], act='silu', out_dtype=jnp.bfloat16)
    x = linear(h, p['ff1_w2'], p['ff1_b2'], scale=0.5, residual=x)
    # MHSA (output projection + residual fused)
    h = layer_norm(x, p['att_ln_g'], p['att_ln_b'])
    attn = rel_pos_mhsa(h, mask_add, p['att'], num_heads=4)
    x = linear(attn, p['att']['wo'], p['att']['bo'], residual=x)
    # Convolution module (possible channel expansion + time downsampling)
    h = layer_norm(x, p['conv_ln_g'], p['conv_ln_b'])
    h = linear_glu(h, p['conv_pw1_w1'], p['conv_pw1_w2'],
                   p['conv_pw1_b1'], p['conv_pw1_b2'])          # pointwise + fused GLU
    bn_scale = p['conv_bn_g'] * (1.0 / jnp.sqrt(1.0 + 1e-5))
    bn_bias = p['conv_dw_b'] * bn_scale + p['conv_bn_b']
    h = depthwise_conv_bn_silu(h, p['conv_dw_w'], bn_scale, bn_bias, stride)
    if 'conv_res_w' in p:
        # TODO(synk): exact residual projection form of blocks.ConformerBlock (source not
        # provided); using strided pointwise projection, which preserves shapes/stride.
        res = linear(x[:, ::stride], p['conv_res_w'], p['conv_res_b'])
    else:
        res = x
    x = linear(h, p['conv_pw2_w'], p['conv_pw2_b'], residual=res)
    # FFN 2 (half-step)
    h = layer_norm(x, p['ff2_ln_g'], p['ff2_ln_b'])
    h = linear(h, p['ff2_w1'], p['ff2_b1'], act='silu', out_dtype=jnp.bfloat16)
    x = linear(h, p['ff2_w2'], p['ff2_b2'], scale=0.5, residual=x)
    return layer_norm(x, p['norm_g'], p['norm_b'])


# --------------------------------------------------------------------------
# Forward passes: front_end (CNN3d + MaxPool3d + ResNet18) and back_end (Conformer)
# --------------------------------------------------------------------------
def _front_end_forward(x, fp):
    # x: (B, 1, T, H, W) -> channels-last
    B = x.shape[0]
    xc = jnp.transpose(x, (0, 2, 3, 4, 1))                       # (B, T, H, W, 1)
    h = conv3d(xc, fp['conv3d_w'], fp['conv3d_b'],
               stride=(1, 2, 2), padding=(2, 3, 3))
    h = batch_norm(h, fp['bn3d_g'], fp['bn3d_b'])
    h = relu(h)
    h = lax.reduce_window(h, -jnp.inf, lax.max,
                          (1, 1, 3, 3, 1), (1, 1, 2, 2, 1), 'SAME')
    Bc, Tc, Hc, Wc, Cc = h.shape
    # VideoToImages: (B, T, H, W, C) -> (B*T, H, W, C)
    h = h.reshape(B * Tc, Hc, Wc, Cc)
    strides = [(1, 1), (1, 1), (2, 2), (1, 1), (2, 2), (1, 1), (2, 2), (1, 1)]
    for bp, st in zip(fp['resnet_blocks'], strides):
        h = resnet_block(h, bp, st)
    h = jnp.mean(h, axis=(1, 2))                                 # GlobalAvgPool2d -> (B*T, 512)
    h = linear(h, fp['res_head_w'], fp['res_head_b'])            # (B*T, 256)
    return h


front_end_forward = jax.jit(_front_end_forward)


@functools.partial(jax.jit, static_argnames=('strides', 'interctc_blocks'))
def back_end_forward(x, lengths, block_params, interctc_params, *,
                     strides, interctc_blocks=(3, 6, 9)):
    interctc_outputs = {}
    j = 0
    for i, (p, stride) in enumerate(zip(block_params, strides)):
        T = x.shape[1]
        mask_add = jnp.where(jnp.arange(T)[None, :] < lengths[:, None],
                             0.0, -1e9)[:, None, :].astype(jnp.float32)  # (B, 1, T)
        x = conformer_block(x, mask_add, p, stride)
        if i + 1 in interctc_blocks:
            ip = interctc_params[j]
            j += 1
            logits = linear(x, ip['w1'], ip['b1'])
            x = linear(jax.nn.softmax(logits, axis=-1), ip['w2'], ip['b2'],
                       residual=x)
            key = 'ctc_' + str(i)
        else:
            logits = None
        if stride > 1:
            lengths = (lengths - 1) // stride + 1
        if logits is not None:
            interctc_outputs[key] = [logits, lengths]
    return x, lengths, interctc_outputs


def encoder_forward(x, lengths, params):
    B = x.shape[0]
    T = x.shape[2]
    feats = front_end_forward(x, params['front'])      # (B*T, 256)
    # unsqueeze/unsqueeze + ImagesToVideos + squeeze/squeeze + transpose(1,2)
    feats = feats.reshape(B, T, -1)                    # (B, T, 256)
    y, lengths, inter = back_end_forward(
        feats, lengths, params['blocks'], params['interctc'],
        strides=tuple(params['strides']), interctc_blocks=(3, 6, 9))
    y = linear(y, params['head_w'], params['head_b'])  # (B, T', 256)
    return y, lengths, inter


# --------------------------------------------------------------------------
# Deterministic parameter initialization (shapes follow the module's __init__).
# Matmul / conv weights are stored in bf16 (MXU operand dtype); biases / norm
# params / depthwise weights stay f32.
# --------------------------------------------------------------------------
class ParamGen:
    def __init__(self, seed=0):
        self._key = jax.random.PRNGKey(seed)

    def normal(self, shape, fan_in):
        self._key, k = jax.random.split(self._key)
        return jax.random.normal(k, shape, jnp.float32) / jnp.sqrt(float(fan_in))

    def zeros(self, shape):
        return jnp.zeros(shape, jnp.float32)

    def ones(self, shape):
        return jnp.ones(shape, jnp.float32)


def init_params(seed=0):
    g = ParamGen(seed)
    bf = jnp.bfloat16
    P = {}

    # --- front end ---
    front = {
        'conv3d_w': g.normal((5, 7, 7, 1, 64), 1 * 5 * 7 * 7).astype(bf),
        'conv3d_b': g.zeros((64,)),
        'bn3d_g': g.ones((64,)), 'bn3d_b': g.zeros((64,)),
    }
    cfg = [(64, 64), (64, 64), (64, 128), (128, 128),
           (128, 256), (256, 256), (256, 512), (512, 512)]
    strides = [(1, 1), (1, 1), (2, 2), (1, 1), (2, 2), (1, 1), (2, 2), (1, 1)]
    rblocks = []
    for (cin, cout), st in zip(cfg, strides):
        bp = {'w1': g.normal((3, 3, cin, cout), cin * 9).astype(bf),
              'bn1_g': g.ones((cout,)), 'bn1_b': g.zeros((cout,)),
              'w2': g.normal((3, 3, cout, cout), cout * 9).astype(bf),
              'bn2_g': g.ones((cout,)), 'bn2_b': g.zeros((cout,))}
        if st != (1, 1) or cin != cout:
            bp['w_sc'] = g.normal((1, 1, cin, cout), cin).astype(bf)
            bp['bn_sc_g'] = g.ones((cout,))
            bp['bn_sc_b'] = g.zeros((cout,))
        rblocks.append(bp)
    front['resnet_blocks'] = rblocks
    front['res_head_w'] = g.normal((512, 256), 512).astype(bf)
    front['res_head_b'] = g.zeros((256,))
    P['front'] = front

    # --- back end: Efficient Conformer, dim_model=[256,360], num_blocks=[6,6] ---
    dim_model = [256, 360]
    num_blocks = [6, 6]
    ff_ratio, heads, ksize, vocab, conv_stride = 4, 4, 15, 256, 2
    interctc_blocks = [3, 6, 9]
    blocks, interctc, block_strides = [], [], []
    i = 1
    for stage in range(2):
        for bidx in range(num_blocks[stage]):
            down = (bidx == num_blocks[stage] - 1 and stage < 1)
            din = dim_model[stage]
            dout = dim_model[stage + (1 if down else 0)]
            stride = conv_stride if down else 1
            dh = din // heads
            p = {'ff1_ln_g': g.ones((din,)), 'ff1_ln_b': g.zeros((din,)),
                 'ff1_w1': g.normal((din, din * ff_ratio), din).astype(bf),
                 'ff1_b1': g.zeros((din * ff_ratio,)),
                 'ff1_w2': g.normal((din * ff_ratio, din), din * ff_ratio).astype(bf),
                 'ff1_b2': g.zeros((din,)),
                 'att_ln_g': g.ones((din,)), 'att_ln_b': g.zeros((din,)),
                 'conv_ln_g': g.ones((din,)), 'conv_ln_b': g.zeros((din,)),
                 'conv_pw1_w1': g.normal((din, dout), din).astype(bf),
                 'conv_pw1_w2': g.normal((din, dout), din).astype(bf),
                 'conv_pw1_b1': g.zeros((dout,)),
                 'conv_pw1_b2': g.zeros((dout,)),
                 'conv_dw_w': g.normal((ksize, dout), ksize),
                 'conv_dw_b': g.zeros((dout,)),
                 'conv_bn_g': g.ones((dout,)), 'conv_bn_b': g.zeros((dout,)),
                 'conv_pw2_w': g.normal((dout, dout), dout).astype(bf),
                 'conv_pw2_b': g.zeros((dout,)),
                 'ff2_ln_g': g.ones((dout,)), 'ff2_ln_b': g.zeros((dout,)),
                 'ff2_w1': g.normal((dout, dout * ff_ratio), dout).astype(bf),
                 'ff2_b1': g.zeros((dout * ff_ratio,)),
                 'ff2_w2': g.normal((dout * ff_ratio, dout), dout * ff_ratio).astype(bf),
                 'ff2_b2': g.zeros((dout,)),
                 'norm_g': g.ones((dout,)), 'norm_b': g.zeros((dout,))}
            att = {'wqkv': g.normal((din, 3 * din), din).astype(bf),
                   'bqkv': g.zeros((3 * din,)),
                   'wpos': g.normal((din, din), din).astype(bf),
                   'wo': g.normal((din, din), din).astype(bf),
                   'bo': g.zeros((din,)),
                   'u': g.normal((heads, dh), dh),
                   'v': g.normal((heads, dh), dh)}
            p['att'] = att
            if din != dout or stride > 1:
                p['conv_res_w'] = g.normal((din, dout), din).astype(bf)
                p['conv_res_b'] = g.zeros((dout,))
            blocks.append(p)
            block_strides.append(stride)
            if i in interctc_blocks:
                interctc.append({'w1': g.normal((dout, vocab), dout).astype(bf),
                                 'b1': g.zeros((vocab,)),
                                 'w2': g.normal((vocab, dout), vocab).astype(bf),
                                 'b2': g.zeros((dout,))})
            i += 1
    P['blocks'] = blocks
    P['strides'] = block_strides
    P['interctc'] = interctc
    P['head_w'] = g.normal((360, 256), 360).astype(bf)
    P['head_b'] = g.zeros((256,))
    return P


# --------------------------------------------------------------------------
if __name__ == "__main__":
    key = jax.random.PRNGKey(0)
    B, C, T, H, W = 2, 1, 8, 32, 32
    x = jax.random.normal(key, (B, C, T, H, W), jnp.float32)
    lengths = jnp.array([8, 6], jnp.int32)

    params = init_params(seed=0)
    y, out_lengths, interctc_outputs = encoder_forward(x, lengths, params)
    y = jax.block_until_ready(y)

    # shape / semantics sanity checks
    assert y.shape == (B, 4, 256), y.shape                     # T downsampled 8 -> 4, vocab=256
    assert int(out_lengths[0]) == 4 and int(out_lengths[1]) == 3
    assert set(interctc_outputs.keys()) == {"ctc_2", "ctc_5", "ctc_8"}
    assert interctc_outputs["ctc_2"][0].shape == (B, 8, 256)
    assert interctc_outputs["ctc_5"][0].shape == (B, 4, 256)
    assert interctc_outputs["ctc_8"][0].shape == (B, 4, 256)
    assert bool(jnp.all(jnp.isfinite(y)))
    print("KERNEL_OK")
</pallas_src>

<mosaic_0001>
module attributes {stable_mosaic.version = 11 : i64} {
  func.func @_mm_kernel(%arg0: i32, %arg1: i32, %arg2: i32, %arg3: memref<16x512xbf16, #tpu.memory_space<vmem>>, %arg4: memref<512x256xbf16, #tpu.memory_space<vmem>>, %arg5: memref<1x256xf32, #tpu.memory_space<vmem>>, %arg6: memref<16x256xf32, #tpu.memory_space<vmem>>, %arg7: memref<16x256xf32, #tpu.memory_space<vmem>>) attributes {dimension_semantics = [#tpu.dimension_semantics<parallel>, #tpu.dimension_semantics<parallel>, #tpu.dimension_semantics<arbitrary>], iteration_bounds = array<i64: 1, 1, 1>, scalar_prefetch = 0 : i64, scratch_operands = 1 : i64, tpu.core_type = #tpu.core_type<tc>, window_params = [{transform_indices = @transform_0, window_bounds = array<i64: 16, 512>}, {transform_indices = @transform_1, window_bounds = array<i64: 512, 256>}, {transform_indices = @transform_2, window_bounds = array<i64: 1, 256>}, {transform_indices = @transform_3, window_bounds = array<i64: 16, 256>}]} {
    %c0_i32 = arith.constant 0 : i32
    %0 = arith.cmpi eq, %arg2, %c0_i32 : i32
    %1 = arith.extui %0 : i1 to i32
    %c0_i32_0 = arith.constant 0 : i32
    %2 = arith.cmpi ne, %1, %c0_i32_0 : i32
    scf.if %2 {
      %cst_10 = arith.constant 0.000000e+00 : f32
      %12 = vector.broadcast %cst_10 : f32 to vector<16x256xf32>
      %c0_11 = arith.constant 0 : index
      %c0_12 = arith.constant 0 : index
      %13 = vector.load %arg7[%c0_11, %c0_12] : memref<16x256xf32, #tpu.memory_space<vmem>>, vector<16x256xf32>
      tpu.vector_store %arg7[%c0_11, %c0_12], %12 {strides = array<i32>} : memref<16x256xf32, #tpu.memory_space<vmem>>, vector<16x256xf32>,
    } else {
    }
    %c0 = arith.constant 0 : index
    %c0_1 = arith.constant 0 : index
    %3 = vector.load %arg7[%c0, %c0_1] : memref<16x256xf32, #tpu.memory_space<vmem>>, vector<16x256xf32>
    %c0_2 = arith.constant 0 : index
    %c0_3 = arith.constant 0 : index
    %4 = vector.load %arg3[%c0_2, %c0_3] : memref<16x512xbf16, #tpu.memory_space<vmem>>, vector<16x512xbf16>
    %c0_4 = arith.constant 0 : index
    %c0_5 = arith.constant 0 : index
    %5 = vector.load %arg4[%c0_4, %c0_5] : memref<512x256xbf16, #tpu.memory_space<vmem>>, vector<512x256xbf16>
    %cst = arith.constant dense<0.000000e+00> : vector<16x256xf32>
    %6 = tpu.matmul %4, %5, %cst {dimension_numbers = #tpu.dot_dimension_numbers<[1], [0], [0], [1], [0, 0, 1, 1], [], []>} : vector<16x512xbf16>, vector<512x256xbf16>, vector<16x256xf32> -> vector<16x256xf32>
    %7 = arith.addf %3, %6 : vector<16x256xf32>
    %c0_6 = arith.constant 0 : index
    %c0_7 = arith.constant 0 : index
    %8 = vector.load %arg7[%c0_6, %c0_7] : memref<16x256xf32, #tpu.memory_space<vmem>>, vector<16x256xf32>
    tpu.vector_store %arg7[%c0_6, %c0_7], %7 {strides = array<i32>} : memref<16x256xf32, #tpu.memory_space<vmem>>, vector<16x256xf32>,
    %c0_i32_8 = arith.constant 0 : i32
    %9 = arith.cmpi eq, %arg2, %c0_i32_8 : i32
    %10 = arith.extui %9 : i1 to i32
    %c0_i32_9 = arith.constant 0 : i32
    %11 = arith.cmpi ne, %10, %c0_i32_9 : i32
    scf.if %11 {
      %c0_10 = arith.constant 0 : index
      %c0_11 = arith.constant 0 : index
      %12 = vector.load %arg7[%c0_10, %c0_11] : memref<16x256xf32, #tpu.memory_space<vmem>>, vector<16x256xf32>
      %c0_12 = arith.constant 0 : index
      %c0_13 = arith.constant 0 : index
      %13 = vector.load %arg5[%c0_12, %c0_13] : memref<1x256xf32, #tpu.memory_space<vmem>>, vector<1x256xf32>
      %14 = vector.broadcast %13 : vector<1x256xf32> to vector<16x256xf32>
      %15 = arith.addf %12, %14 : vector<16x256xf32>
      %c0_14 = arith.constant 0 : index
      %c0_15 = arith.constant 0 : index
      %16 = vector.load %arg6[%c0_14, %c0_15] : memref<16x256xf32, #tpu.memory_space<vmem>>, vector<16x256xf32>
      tpu.vector_store %arg6[%c0_14, %c0_15], %15 {strides = array<i32>} : memref<16x256xf32, #tpu.memory_space<vmem>>, vector<16x256xf32>,
    } else {
    }
    return
  }
  func.func @transform_0(%arg0: i32, %arg1: i32, %arg2: i32) -> (i32, i32) {
    %c0_i32 = arith.constant 0 : i32
    return %arg0, %arg2 : i32, i32
  }
  func.func @transform_1(%arg0: i32, %arg1: i32, %arg2: i32) -> (i32, i32) {
    %c0_i32 = arith.constant 0 : i32
    return %arg2, %arg1 : i32, i32
  }
  func.func @transform_2(%arg0: i32, %arg1: i32, %arg2: i32) -> (i32, i32) {
    %c0_i32 = arith.constant 0 : i32
    %c0_i32_0 = arith.constant 0 : i32
    return %c0_i32, %arg1 : i32, i32
  }
  func.func @transform_3(%arg0: i32, %arg1: i32, %arg2: i32) -> (i32, i32) {
    %c0_i32 = arith.constant 0 : i32
    return %arg0, %arg1 : i32, i32
  }
}

</mosaic_0001>

<llo_original>
// kernel: _mm_jit.1
$region0: #{_mm_jit.1}
  #allocation0 [shape = 'u32[]', space=smem, size = 0x4, offset = 0x4, fixed_abs, tag = 'smem constant byte address 0x4 - core index']
  #allocation1 [shape = 'u32[144,128]{1,0:T(1,128)}', space=vmem, size = 0x12000, scoped, tag = 'internal scratch']
  #allocation2 [shape = 'f32[16,256]{1,0:T(8,128)}', space=vmem, size = 0x4000, scoped, tag = 'scratch operand']
  %s0 = inlined_call_operand.vmem [shape: bf16[16,512], index: 0, kind: input, shape index: {}]
  %s1 = inlined_call_operand.hbm [shape: bf16[512,256], index: 1, kind: input, shape index: {}]
  %s2 = inlined_call_operand.vmem [shape: f32[1,256], index: 2, kind: input, shape index: {}]
  %s3 = inlined_call_operand.hbm [shape: f32[16,256], index: 3, kind: output, shape index: {}]
  %s4 = sld [smem:[#allocation0]]
  $region34: #{_mm_jit.1} parent=0
    _
  %s6 = ssub.s32 1, %s4
  %s7 = scalar_select 0, %s6, %s4
  $region1: #{_mm_jit.1} parent=0
    #allocation3 [shape = 'u8[262144]{0}', space=vmem, size = 0x40000, scoped, tag = 'input window, operand 1, single buffered']
    #allocation4 [shape = 's32[1]{0}', space=sflag, size = 0x4, scoped, tag = 'scoped memory for _mm_jit.1']
    #allocation5 [shape = 's32[1]{0}', space=sflag, size = 0x4, scoped, tag = 'scoped memory for _mm_jit.1']
    #allocation6 [shape = 'u8[16384]{0}', space=vmem, size = 0x4000, scoped, tag = 'output window, operand 0, single buffered']
    %8 = vsyncpa [#allocation4], 0
    %9 = vsyncpa [#allocation5], 0
    // Predicated region
    $region2: #{_mm_jit.1} parent=1 // pred_check
      _
    $region3: #{_mm_jit.1} parent=1 // pred_check_branch
      %11 = sbr.rel (0) target = $region5
    $region4: #{_mm_jit.1} parent=1 // pred_region
      _
    $region5: #{_mm_jit.1} parent=1 // pred_fallthru
      _
    // Predicated region
    $region6: #{_mm_jit.1} parent=1 // pred_check
      _
    $region7: #{_mm_jit.1} parent=1 // pred_check_branch
      %13 = sbr.rel (0) target = $region9
    $region8: #{_mm_jit.1} parent=1 // pred_region
      %s15 = ssub.s32 8192, 8192
      %16 = vsyncadd [#allocation4], %s15
      %s17 = sshll.u32 [#allocation3], 4
      %s18 = int_to_ptr.vmem [resolvable:$true] %s17
      %23 = dma.hbm_to_vmem [thread:$0]  %s1, 8192, %s18, [#allocation4], 128, 128, 8
    $region9: #{_mm_jit.1} parent=1 // pred_fallthru
      _
    // Predicated region
    $region10: #{_mm_jit.1} parent=1 // pred_check
      _
    $region11: #{_mm_jit.1} parent=1 // pred_check_branch
      %25 = sbr.rel (0) target = $region13
    $region12: #{_mm_jit.1} parent=1 // pred_region
      _
    $region13: #{_mm_jit.1} parent=1 // pred_fallthru
      _
    // Predicated region
    $region14: #{_mm_jit.1} parent=1 // pred_check
      _
    $region15: #{_mm_jit.1} parent=1 // pred_check_branch
      %27 = sbr.rel (0) target = $region17
    $region16: #{_mm_jit.1} parent=1 // pred_region
      %28 = dma.done [#allocation4], 8192
    $region17: #{_mm_jit.1} parent=1 // pred_fallthru
      _
    %p29 = scmp.eq.s32.totalorder 0, 0
    // Predicated region
    $region18: #{_mm_jit.1} parent=1 // pred_check
      %p30 = pneg %p29
    $region19: #{_mm_jit.1} parent=1 // pred_check_branch
      %32 = sbr.rel (%p30) target = $region21
    $region20: #{_mm_jit.1} parent=1 // pred_region
      %33 = vst [vmem:[#allocation2] sm:$0xff] 0.0
      %34 = vst [vmem:[#allocation2 + $0x8] sm:$0xff] 0.0
      %35 = vst [vmem:[#allocation2 + $0x10] sm:$0xff] 0.0
      %36 = vst [vmem:[#allocation2 + $0x18] sm:$0xff] 0.0
    $region21: #{_mm_jit.1} parent=1 // pred_fallthru
      _
    %v37 = vld [vmem:[#allocation2] sm:$0xff]
    %v38 = vld [vmem:[#allocation2 + $0x8] sm:$0xff]
    %v39 = vld [vmem:[#allocation2 + $0x10] sm:$0xff]
    %v40 = vld [vmem:[#allocation2 + $0x18] sm:$0xff]
    %v41 = vld [vmem:[%s0] sm:$0xff]
    %v42 = vld [vmem:[%s0 + $0x8] sm:$0xff]
    %v43 = vld [vmem:[%s0 + $0x10] sm:$0xff]
    %v44 = vld [vmem:[%s0 + $0x18] sm:$0xff]
    %v45 = vld [vmem:[#allocation3] sm:$0xff]
    %v46 = vld [vmem:[#allocation3 + $0x8] sm:$0xff]
    %v47 = vld [vmem:[#allocation3 + $0x10] sm:$0xff]
    %v48 = vld [vmem:[#allocation3 + $0x18] sm:$0xff]
    %v49 = vld [vmem:[#allocation3 + $0x20] sm:$0xff]
    %v50 = vld [vmem:[#allocation3 + $0x28] sm:$0xff]
    %v51 = vld [vmem:[#allocation3 + $0x30] sm:$0xff]
    %v52 = vld [vmem:[#allocation3 + $0x38] sm:$0xff]
    %v53 = vld [vmem:[#allocation3 + $0x40] sm:$0xff]
    %v54 = vld [vmem:[#allocation3 + $0x48] sm:$0xff]
    %v55 = vld [vmem:[#allocation3 + $0x50] sm:$0xff]
    %v56 = vld [vmem:[#allocation3 + $0x58] sm:$0xff]
    %v57 = vld [vmem:[#allocation3 + $0x60] sm:$0xff]
    %v58 = vld [vmem:[#allocation3 + $0x68] sm:$0xff]
    %v59 = vld [vmem:[#allocation3 + $0x70] sm:$0xff]
    %v60 = vld [vmem:[#allocation3 + $0x78] sm:$0xff]
    %v61 = vld [vmem:[#allocation3 + $0x80] sm:$0xff]
    %v62 = vld [vmem:[#allocation3 + $0x88] sm:$0xff]
    %v63 = vld [vmem:[#allocation3 + $0x90] sm:$0xff]
    %v64 = vld [vmem:[#allocation3 + $0x98] sm:$0xff]
    %v65 = vld [vmem:[#allocation3 + $0xa0] sm:$0xff]
    %v66 = vld [vmem:[#allocation3 + $0xa8] sm:$0xff]
    %v67 = vld [vmem:[#allocation3 + $0xb0] sm:$0xff]
    %v68 = vld [vmem:[#allocation3 + $0xb8] sm:$0xff]
    %v69 = vld [vmem:[#allocation3 + $0xc0] sm:$0xff]
    %v70 = vld [vmem:[#allocation3 + $0xc8] sm:$0xff]
    %v71 = vld [vmem:[#allocation3 + $0xd0] sm:$0xff]
    %v72 = vld [vmem:[#allocation3 + $0xd8] sm:$0xff]
    %v73 = vld [vmem:[#allocation3 + $0xe0] sm:$0xff]
    %v74 = vld [vmem:[#allocation3 + $0xe8] sm:$0xff]
    %v75 = vld [vmem:[#allocation3 + $0xf0] sm:$0xff]
    %v76 = vld [vmem:[#allocation3 + $0xf8] sm:$0xff]
    %v77 = vld [vmem:[#allocation3 + $0x100] sm:$0xff]
    %v78 = vld [vmem:[#allocation3 + $0x108] sm:$0xff]
    %v79 = vld [vmem:[#allocation3 + $0x110] sm:$0xff]
    %v80 = vld [vmem:[#allocation3 + $0x118] sm:$0xff]
    %v81 = vld [vmem:[#allocation3 + $0x120] sm:$0xff]
    %v82 = vld [vmem:[#allocation3 + $0x128] sm:$0xff]
    %v83 = vld [vmem:[#allocation3 + $0x130] sm:$0xff]
    %v84 = vld [vmem:[#allocation3 + $0x138] sm:$0xff]
    %v85 = vld [vmem:[#allocation3 + $0x140] sm:$0xff]
    %v86 = vld [vmem:[#allocation3 + $0x148] sm:$0xff]
    %v87 = vld [vmem:[#allocation3 + $0x150] sm:$0xff]
    %v88 = vld [vmem:[#allocation3 + $0x158] sm:$0xff]
    %v89 = vld [vmem:[#allocation3 + $0x160] sm:$0xff]
    %v90 = vld [vmem:[#allocation3 + $0x168] sm:$0xff]
    %v91 = vld [vmem:[#allocation3 + $0x170] sm:$0xff]
    %v92 = vld [vmem:[#allocation3 + $0x178] sm:$0xff]
    %v93 = vld [vmem:[#allocation3 + $0x180] sm:$0xff]
    %v94 = vld [vmem:[#allocation3 + $0x188] sm:$0xff]
    %v95 = vld [vmem:[#allocation3 + $0x190] sm:$0xff]
    %v96 = vld [vmem:[#allocation3 + $0x198] sm:$0xff]
    %v97 = vld [vmem:[#allocation3 + $0x1a0] sm:$0xff]
    %v98 = vld [vmem:[#allocation3 + $0x1a8] sm:$0xff]
    %v99 = vld [vmem:[#allocation3 + $0x1b0] sm:$0xff]
    %v100 = vld [vmem:[#allocation3 + $0x1b8] sm:$0xff]
    %v101 = vld [vmem:[#allocation3 + $0x1c0] sm:$0xff]
    %v102 = vld [vmem:[#allocation3 + $0x1c8] sm:$0xff]
    %v103 = vld [vmem:[#allocation3 + $0x1d0] sm:$0xff]
    %v104 = vld [vmem:[#allocation3 + $0x1d8] sm:$0xff]
    %v105 = vld [vmem:[#allocation3 + $0x1e0] sm:$0xff]
    %v106 = vld [vmem:[#allocation3 + $0x1e8] sm:$0xff]
    %v107 = vld [vmem:[#allocation3 + $0x1f0] sm:$0xff]
    %v108 = vld [vmem:[#allocation3 + $0x1f8] sm:$0xff]
    %v113 = vunpack.c.l.b16 %v41
    %v114 = vunpack.c.h.b16 %v41
    %v115 = vunpack.c.l.b16 %v42
    %v116 = vunpack.c.h.b16 %v42
    %v117 = vunpack.c.l.b16 %v43
    %v118 = vunpack.c.h.b16 %v43
    %v119 = vunpack.c.l.b16 %v44
    %v120 = vunpack.c.h.b16 %v44
    %v121 = vpack.c.b16 %v117, %v113
    %v122 = vpack.c.b16 %v118, %v114
    %v123 = vpack.c.b16 %v119, %v115
    %v124 = vpack.c.b16 %v120, %v116
    %v193 = vunpack.c.l.b16 %v45
    %v194 = vunpack.c.h.b16 %v45
    %v195 = vunpack.c.l.b16 %v46
    %v196 = vunpack.c.h.b16 %v46
    %v197 = vunpack.c.l.b16 %v47
    %v198 = vunpack.c.h.b16 %v47
    %v199 = vunpack.c.l.b16 %v48
    %v200 = vunpack.c.h.b16 %v48
    %v201 = vunpack.c.l.b16 %v49
    %v202 = vunpack.c.h.b16 %v49
    %v203 = vunpack.c.l.b16 %v50
    %v204 = vunpack.c.h.b16 %v50
    %v205 = vunpack.c.l.b16 %v51
    %v206 = vunpack.c.h.b16 %v51
    %v207 = vunpack.c.l.b16 %v52
    %v208 = vunpack.c.h.b16 %v52
    %v209 = vunpack.c.l.b16 %v53
    %v210 = vunpack.c.h.b16 %v53
    %v211 = vunpack.c.l.b16 %v54
    %v212 = vunpack.c.h.b16 %v54
    %v213 = vunpack.c.l.b16 %v55
    %v214 = vunpack.c.h.b16 %v55
    %v215 = vunpack.c.l.b16 %v56
    %v216 = vunpack.c.h.b16 %v56
    %v217 = vunpack.c.l.b16 %v57
    %v218 = vunpack.c.h.b16 %v57
    %v219 = vunpack.c.l.b16 %v58
    %v220 = vunpack.c.h.b16 %v58
    %v221 = vunpack.c.l.b16 %v59
    %v222 = vunpack.c.h.b16 %v59
    %v223 = vunpack.c.l.b16 %v60
    %v224 = vunpack.c.h.b16 %v60
    %v225 = vunpack.c.l.b16 %v61
    %v226 = vunpack.c.h.b16 %v61
    %v227 = vunpack.c.l.b16 %v62
    %v228 = vunpack.c.h.b16 %v62
    %v229 = vunpack.c.l.b16 %v63
    %v230 = vunpack.c.h.b16 %v63
    %v231 = vunpack.c.l.b16 %v64
    %v232 = vunpack.c.h.b16 %v64
    %v233 = vunpack.c.l.b16 %v65
    %v234 = vunpack.c.h.b16 %v65
    %v235 = vunpack.c.l.b16 %v66
    %v236 = vunpack.c.h.b16 %v66
    %v237 = vunpack.c.l.b16 %v67
    %v238 = vunpack.c.h.b16 %v67
    %v239 = vunpack.c.l.b16 %v68
    %v240 = vunpack.c.h.b16 %v68
    %v241 = vunpack.c.l.b16 %v69
    %v242 = vunpack.c.h.b16 %v69
    %v243 = vunpack.c.l.b16 %v70
    %v244 = vunpack.c.h.b16 %v70
    %v245 = vunpack.c.l.b16 %v71
    %v246 = vunpack.c.h.b16 %v71
    %v247 = vunpack.c.l.b16 %v72
    %v248 = vunpack.c.h.b16 %v72
    %v249 = vunpack.c.l.b16 %v73
    %v250 = vunpack.c.h.b16 %v73
    %v251 = vunpack.c.l.b16 %v74
    %v252 = vunpack.c.h.b16 %v74
    %v253 = vunpack.c.l.b16 %v75
    %v254 = vunpack.c.h.b16 %v75
    %v255 = vunpack.c.l.b16 %v76
    %v256 = vunpack.c.h.b16 %v76
    %v257 = vunpack.c.l.b16 %v77
    %v258 = vunpack.c.h.b16 %v77
    %v259 = vunpack.c.l.b16 %v78
    %v260 = vunpack.c.h.b16 %v78
    %v261 = vunpack.c.l.b16 %v79
    %v262 = vunpack.c.h.b16 %v79
    %v263 = vunpack.c.l.b16 %v80
    %v264 = vunpack.c.h.b16 %v80
    %v265 = vunpack.c.l.b16 %v81
    %v266 = vunpack.c.h.b16 %v81
    %v267 = vunpack.c.l.b16 %v82
    %v268 = vunpack.c.h.b16 %v82
    %v269 = vunpack.c.l.b16 %v83
    %v270 = vunpack.c.h.b16 %v83
    %v271 = vunpack.c.l.b16 %v84
    %v272 = vunpack.c.h.b16 %v84
    %v273 = vunpack.c.l.b16 %v85
    %v274 = vunpack.c.h.b16 %v85
    %v275 = vunpack.c.l.b16 %v86
    %v276 = vunpack.c.h.b16 %v86
    %v277 = vunpack.c.l.b16 %v87
    %v278 = vunpack.c.h.b16 %v87
    %v279 = vunpack.c.l.b16 %v88
    %v280 = vunpack.c.h.b16 %v88
    %v281 = vunpack.c.l.b16 %v89
    %v282 = vunpack.c.h.b16 %v89
    %v283 = vunpack.c.l.b16 %v90
    %v284 = vunpack.c.h.b16 %v90
    %v285 = vunpack.c.l.b16 %v91
    %v286 = vunpack.c.h.b16 %v91
    %v287 = vunpack.c.l.b16 %v92
    %v288 = vunpack.c.h.b16 %v92
    %v289 = vunpack.c.l.b16 %v93
    %v290 = vunpack.c.h.b16 %v93
    %v291 = vunpack.c.l.b16 %v94
    %v292 = vunpack.c.h.b16 %v94
    %v293 = vunpack.c.l.b16 %v95
    %v294 = vunpack.c.h.b16 %v95
    %v295 = vunpack.c.l.b16 %v96
    %v296 = vunpack.c.h.b16 %v96
    %v297 = vunpack.c.l.b16 %v97
    %v298 = vunpack.c.h.b16 %v97
    %v299 = vunpack.c.l.b16 %v98
    %v300 = vunpack.c.h.b16 %v98
    %v301 = vunpack.c.l.b16 %v99
    %v302 = vunpack.c.h.b16 %v99
    %v303 = vunpack.c.l.b16 %v100
    %v304 = vunpack.c.h.b16 %v100
    %v305 = vunpack.c.l.b16 %v101
    %v306 = vunpack.c.h.b16 %v101
    %v307 = vunpack.c.l.b16 %v102
    %v308 = vunpack.c.h.b16 %v102
    %v309 = vunpack.c.l.b16 %v103
    %v310 = vunpack.c.h.b16 %v103
    %v311 = vunpack.c.l.b16 %v104
    %v312 = vunpack.c.h.b16 %v104
    %v313 = vunpack.c.l.b16 %v105
    %v314 = vunpack.c.h.b16 %v105
    %v315 = vunpack.c.l.b16 %v106
    %v316 = vunpack.c.h.b16 %v106
    %v317 = vunpack.c.l.b16 %v107
    %v318 = vunpack.c.h.b16 %v107
    %v319 = vunpack.c.l.b16 %v108
    %v320 = vunpack.c.h.b16 %v108
    %v321 = vpack.c.b16 %v195, %v193
    %v322 = vpack.c.b16 %v196, %v194
    %v323 = vpack.c.b16 %v199, %v197
    %v324 = vpack.c.b16 %v200, %v198
    %v325 = vpack.c.b16 %v203, %v201
    %v326 = vpack.c.b16 %v204, %v202
    %v327 = vpack.c.b16 %v207, %v205
    %v328 = vpack.c.b16 %v208, %v206
    %v329 = vpack.c.b16 %v211, %v209
    %v330 = vpack.c.b16 %v212, %v210
    %v331 = vpack.c.b16 %v215, %v213
    %v332 = vpack.c.b16 %v216, %v214
    %v333 = vpack.c.b16 %v219, %v217
    %v334 = vpack.c.b16 %v220, %v218
    %v335 = vpack.c.b16 %v223, %v221
    %v336 = vpack.c.b16 %v224, %v222
    %v337 = vpack.c.b16 %v227, %v225
    %v338 = vpack.c.b16 %v228, %v226
    %v339 = vpack.c.b16 %v231, %v229
    %v340 = vpack.c.b16 %v232, %v230
    %v341 = vpack.c.b16 %v235, %v233
    %v342 = vpack.c.b16 %v236, %v234
    %v343 = vpack.c.b16 %v239, %v237
    %v344 = vpack.c.b16 %v240, %v238
    %v345 = vpack.c.b16 %v243, %v241
    %v346 = vpack.c.b16 %v244, %v242
    %v347 = vpack.c.b16 %v247, %v245
    %v348 = vpack.c.b16 %v248, %v246
    %v349 = vpack.c.b16 %v251, %v249
    %v350 = vpack.c.b16 %v252, %v250
    %v351 = vpack.c.b16 %v255, %v253
    %v352 = vpack.c.b16 %v256, %v254
    %v353 = vpack.c.b16 %v259, %v257
    %v354 = vpack.c.b16 %v260, %v258
    %v355 = vpack.c.b16 %v263, %v261
    %v356 = vpack.c.b16 %v264, %v262
    %v357 = vpack.c.b16 %v267, %v265
    %v358 = vpack.c.b16 %v268, %v266
    %v359 = vpack.c.b16 %v271, %v269
    %v360 = vpack.c.b16 %v272, %v270
    %v361 = vpack.c.b16 %v275, %v273
    %v362 = vpack.c.b16 %v276, %v274
    %v363 = vpack.c.b16 %v279, %v277
    %v364 = vpack.c.b16 %v280, %v278
    %v365 = vpack.c.b16 %v283, %v281
    %v366 = vpack.c.b16 %v284, %v282
    %v367 = vpack.c.b16 %v287, %v285
    %v368 = vpack.c.b16 %v288, %v286
    %v369 = vpack.c.b16 %v291, %v289
    %v370 = vpack.c.b16 %v292, %v290
    %v371 = vpack.c.b16 %v295, %v293
    %v372 = vpack.c.b16 %v296, %v294
    %v373 = vpack.c.b16 %v299, %v297
    %v374 = vpack.c.b16 %v300, %v298
    %v375 = vpack.c.b16 %v303, %v301
    %v376 = vpack.c.b16 %v304, %v302
    %v377 = vpack.c.b16 %v307, %v305
    %v378 = vpack.c.b16 %v308, %v306
    %v379 = vpack.c.b16 %v311, %v309
    %v380 = vpack.c.b16 %v312, %v310
    %v381 = vpack.c.b16 %v315, %v313
    %v382 = vpack.c.b16 %v316, %v314
    %v383 = vpack.c.b16 %v319, %v317
    %v384 = vpack.c.b16 %v320, %v318
    %449 = vmatprep.subr.bf16.mxu0 %v322
    %450 = vmatpush1.bf16.msra.mxu0 %v321
    %451 = vmatprep.subr.bf16.mxu0 %v324
    %452 = vmatpush1.bf16.msra.mxu0 %v323
    %453 = vmatprep.subr.bf16.mxu0 %v326
    %454 = vmatpush1.bf16.msra.mxu0 %v325
    %455 = vmatprep.subr.bf16.mxu0 %v328
    %456 = vmatpush1.bf16.msra.mxu0 %v327
    %457 = vmatprep.subr.bf16.mxu0 %v330
    %458 = vmatpush1.bf16.msra.mxu0 %v329
    %459 = vmatprep.subr.bf16.mxu0 %v332
    %460 = vmatpush1.bf16.msra.mxu0 %v331
    %461 = vmatprep.subr.bf16.mxu0 %v334
    %462 = vmatpush1.bf16.msra.mxu0 %v333
    %463 = vmatprep.subr.bf16.mxu0 %v336
    %464 = vmatpush1.bf16.msra.mxu0 %v335
    %465 = vmatprep.subr.bf16.mxu0 %v338
    %466 = vmatpush1.bf16.msra.mxu0 %v337
    %467 = vmatprep.subr.bf16.mxu0 %v340
    %468 = vmatpush1.bf16.msra.mxu0 %v339
    %469 = vmatprep.subr.bf16.mxu0 %v342
    %470 = vmatpush1.bf16.msra.mxu0 %v341
    %471 = vmatprep.subr.bf16.mxu0 %v344
    %472 = vmatpush1.bf16.msra.mxu0 %v343
    %473 = vmatprep.subr.bf16.mxu0 %v346
    %474 = vmatpush1.bf16.msra.mxu0 %v345
    %475 = vmatprep.subr.bf16.mxu0 %v348
    %476 = vmatpush1.bf16.msra.mxu0 %v347
    %477 = vmatprep.subr.bf16.mxu0 %v350
    %478 = vmatpush1.bf16.msra.mxu0 %v349
    %479 = vmatprep.subr.bf16.mxu0 %v352
    %480 = vmatpush1.bf16.msra.mxu0 %v351
    %481 = vmatprep.mubr.bf16.mxu0 %v122
    %482 = vmatmul.mubr.bf16.gmra.mrb[0].mxu0 %v121
    %v483 = vpop.f32.mrb[0].mxu0
    %v484 = vadd.f32 0.0, %v483
    %v485 = vpop.f32.mrb[0].mxu0
    %v486 = vadd.f32 0.0, %v485
    %v487 = vpop.f32.mrb[0].mxu0
    %v488 = vadd.f32 0.0, %v487
    %v489 = vpop.f32.mrb[0].mxu0
    %v490 = vadd.f32 0.0, %v489
    %491 = vdwg.mxu0
    %492 = vmatprep.subr.bf16.mxu0 %v354
    %493 = vmatpush1.bf16.msra.mxu0 %v353
    %494 = vmatprep.subr.bf16.mxu0 %v356
    %495 = vmatpush1.bf16.msra.mxu0 %v355
    %496 = vmatprep.subr.bf16.mxu0 %v358
    %497 = vmatpush1.bf16.msra.mxu0 %v357
    %498 = vmatprep.subr.bf16.mxu0 %v360
    %499 = vmatpush1.bf16.msra.mxu0 %v359
    %500 = vmatprep.subr.bf16.mxu0 %v362
    %501 = vmatpush1.bf16.msra.mxu0 %v361
    %502 = vmatprep.subr.bf16.mxu0 %v364
    %503 = vmatpush1.bf16.msra.mxu0 %v363
    %504 = vmatprep.subr.bf16.mxu0 %v366
    %505 = vmatpush1.bf16.msra.mxu0 %v365
    %506 = vmatprep.subr.bf16.mxu0 %v368
    %507 = vmatpush1.bf16.msra.mxu0 %v367
    %508 = vmatprep.subr.bf16.mxu0 %v370
    %509 = vmatpush1.bf16.msra.mxu0 %v369
    %510 = vmatprep.subr.bf16.mxu0 %v372
    %511 = vmatpush1.bf16.msra.mxu0 %v371
    %512 = vmatprep.subr.bf16.mxu0 %v374
    %513 = vmatpush1.bf16.msra.mxu0 %v373
    %514 = vmatprep.subr.bf16.mxu0 %v376
    %515 = vmatpush1.bf16.msra.mxu0 %v375
    %516 = vmatprep.subr.bf16.mxu0 %v378
    %517 = vmatpush1.bf16.msra.mxu0 %v377
    %518 = vmatprep.subr.bf16.mxu0 %v380
    %519 = vmatpush1.bf16.msra.mxu0 %v379
    %520 = vmatprep.subr.bf16.mxu0 %v382
    %521 = vmatpush1.bf16.msra.mxu0 %v381
    %522 = vmatprep.subr.bf16.mxu0 %v384
    %523 = vmatpush1.bf16.msra.mxu0 %v383
    %524 = vmatprep.mubr.bf16.mxu0 %v124
    %525 = vmatmul.mubr.bf16.gmra.mrb[0].mxu0 %v123
    %v526 = vpop.f32.mrb[0].mxu0
    %v527 = vadd.f32 %v484, %v526
    %v528 = vpop.f32.mrb[0].mxu0
    %v529 = vadd.f32 %v486, %v528
    %v530 = vpop.f32.mrb[0].mxu0
    %v531 = vadd.f32 %v488, %v530
    %v532 = vpop.f32.mrb[0].mxu0
    %v533 = vadd.f32 %v490, %v532
    %534 = vdwg.mxu0
    %v535 = vadd.f32 %v37, %v527
    %v536 = vadd.f32 %v38, %v529
    %v537 = vadd.f32 %v39, %v531
    %v538 = vadd.f32 %v40, %v533
    %539 = vst [vmem:[#allocation2] sm:$0xff] %v535
    %540 = vst [vmem:[#allocation2 + $0x8] sm:$0xff] %v536
    %541 = vst [vmem:[#allocation2 + $0x10] sm:$0xff] %v537
    %542 = vst [vmem:[#allocation2 + $0x18] sm:$0xff] %v538
    // Predicated region
    $region22: #{_mm_jit.1} parent=1 // pred_check
      %p543 = pneg %p29
    $region23: #{_mm_jit.1} parent=1 // pred_check_branch
      %545 = sbr.rel (%p543) target = $region25
    $region24: #{_mm_jit.1} parent=1 // pred_region
      %v546 = vld [vmem:[#allocation2] sm:$0xff]
      %v547 = vld [vmem:[#allocation2 + $0x8] sm:$0xff]
      %v548 = vld [vmem:[#allocation2 + $0x10] sm:$0xff]
      %v549 = vld [vmem:[#allocation2 + $0x18] sm:$0xff]
      %v550 = vld [vmem:[%s2] sm:$0x3]
      %v552 = vlaneseq
      %v553 = vshrl.u32 %v552, 7
      %v554 = vsub.s32 0, %v553
      %v555 = vrot.slane %v550, %v554
      %v556 = vlaneseq
      %v557 = vshrl.u32 %v556, 7
      %v558 = vsub.s32 1, %v557
      %v559 = vrot.slane %v550, %v558
      %v562 = vadd.f32 %v546, %v555
      %v563 = vadd.f32 %v547, %v559
      %v564 = vadd.f32 %v548, %v555
      %v565 = vadd.f32 %v549, %v559
      %566 = vst [vmem:[#allocation6] sm:$0xff] %v562
      %567 = vst [vmem:[#allocation6 + $0x8] sm:$0xff] %v563
      %568 = vst [vmem:[#allocation6 + $0x10] sm:$0xff] %v564
      %569 = vst [vmem:[#allocation6 + $0x18] sm:$0xff] %v565
    $region25: #{_mm_jit.1} parent=1 // pred_fallthru
      _
    // Predicated region
    $region26: #{_mm_jit.1} parent=1 // pred_check
      _
    $region27: #{_mm_jit.1} parent=1 // pred_check_branch
      %571 = sbr.rel (0) target = $region29
    $region28: #{_mm_jit.1} parent=1 // pred_region
      %s573 = ssub.s32 512, 512
      %574 = vsyncadd [#allocation5], %s573
      %s575 = sshll.u32 [#allocation6], 4
      %s576 = int_to_ptr.vmem [resolvable:$true] %s575
      %581 = dma.vmem_to_hbm [thread:$0]  %s576, 512, %s3, [#allocation5], 256, 256, 16
    $region29: #{_mm_jit.1} parent=1 // pred_fallthru
      _
    // Predicated region
    $region30: #{_mm_jit.1} parent=1 // pred_check
      _
    $region31: #{_mm_jit.1} parent=1 // pred_check_branch
      %583 = sbr.rel (0) target = $region33
    $region32: #{_mm_jit.1} parent=1 // pred_region
      %584 = dma.done [#allocation5], 512
    $region33: #{_mm_jit.1} parent=1 // pred_fallthru
      _
    %585 = vsyncpa [#allocation4], 1
    %586 = vsyncpa [#allocation5], 1

</llo_original>
